<compile_context>
chip_gen: v6e
topology: v6e:2x2x1
jax: 0.10.0
libtpu: 0.0.40
codegen_flags: <defaults>
</compile_context>

<pallas_src>
import numpy as np
import jax
import jax.numpy as jnp
from jax.experimental import pallas as pl
from jax.experimental.pallas import tpu as pltpu

EPS = float(np.finfo(np.float32).eps)


# ----------------------------- kernels --------------------------------------

def _planar_kernel_keepdim(scal_ref, wv_ref, z_ref, fz_ref, ld_ref):
    # scal_ref : SMEM (2,)   -> [b, w @ v_hat^T]
    # wv_ref   : VMEM (C, 2) -> column 0 = w, column 1 = v_hat
    # z/fz     : VMEM (TN, C, TS)
    # ld       : VMEM (TN, TS) dense store, or (TN, 1, TS) layout fallback
    b = scal_ref[0]
    wtv = scal_ref[1]

    zb = z_ref[...].astype(jnp.float32)            # (TN, C, TS)
    wv = wv_ref[...]                               # (C, 2)
    wcol = wv[:, 0:1][None]                        # (1, C, 1)
    vcol = wv[:, 1:2][None]                        # (1, C, 1)

    # 1x1 conv == per-pixel dot product over channels.
    wtz = jnp.sum(zb * wcol, axis=1, keepdims=True) + b       # (TN, 1, TS)
    t = jnp.tanh(wtz)

    fz_ref[...] = (zb + vcol * t).astype(fz_ref.dtype)        # (TN, C, TS)
    det = 1.0 + (1.0 - t * t) * wtv                            # (TN, 1, TS)
    ld = jnp.log(jnp.abs(det) + EPS)
    if len(ld_ref.shape) == 2:
        ld_ref[...] = ld[:, 0, :]          # dense (TN, TS): full sublane lines
    else:
        ld_ref[...] = ld                   # (TN, 1, TS) fallback


def _planar_kernel_sum(scal_ref, wv_ref, z_ref, fz_ref, lds_ref):
    # keepdim=False: lds_ref is a (1, TN, 1, 1) per-image partial-sum accumulator
    # resident across the last ("arbitrary") spatial grid axis.
    @pl.when(pl.program_id(2) == 0)
    def _():
        lds_ref[...] = jnp.zeros_like(lds_ref)

    b = scal_ref[0]
    wtv = scal_ref[1]

    zb = z_ref[...].astype(jnp.float32)            # (TN, C, TS)
    wv = wv_ref[...]
    wcol = wv[:, 0:1][None]
    vcol = wv[:, 1:2][None]

    wtz = jnp.sum(zb * wcol, axis=1, keepdims=True) + b
    t = jnp.tanh(wtz)

    fz_ref[...] = (zb + vcol * t).astype(fz_ref.dtype)
    det = 1.0 + (1.0 - t * t) * wtv
    ld = jnp.log(jnp.abs(det) + EPS)                           # (TN, 1, TS)
    part = jnp.sum(ld, axis=(1, 2), keepdims=True)             # (TN, 1, 1)
    lds_ref[...] += part[None]                                 # (1, TN, 1, 1)


# ----------------------------- sizing helpers --------------------------------

def _round_up(x, m):
    return -(-int(x) // int(m)) * int(m)


def _vmem_capacity_bytes():
    """Per-core VMEM capacity; conservative 64 MiB (v7x) if the query fails."""
    try:
        info = pltpu.get_tpu_info()
        cap = getattr(info, "vmem_capacity_bytes", None)
        if cap:
            return int(cap)
    except Exception:
        pass
    return 64 << 20


def _largest_divisor_leq(n, cap):
    cap = int(max(1, min(n, cap)))
    for d in range(cap, 0, -1):
        if n % d == 0:
            return d
    return 1


def _largest_aligned_divisor(s, cap):
    """Largest multiple of 128 that divides s and is <= cap (0 if none)."""
    best = 0
    m = 128
    cap = min(int(s), int(cap))
    while m <= cap:
        if s % m == 0:
            best = m
        m += 128
    return best


def _pick_tn(n, cap):
    """Largest divisor of n <= cap, lightly preferring tn % 8 == 0 so the
    keepdim=True log-det block can be stored as dense (TN, TS) sublane lines."""
    cap = int(max(1, min(n, cap)))
    if cap >= n:
        return n
    best = _largest_divisor_leq(n, cap)
    best8 = 0
    d = cap - cap % 8
    while d >= 8:
        if n % d == 0:
            best8 = d
            break
        d -= 8
    if best8 and 2 * best8 >= best:
        return best8
    return best


def _choose_tiles(n, c, s, target_elems):
    """Pick (TN, TS) so each z block carries ~target_elems un-padded elements."""
    if c * s <= target_elems or s % 128 != 0:
        ts = s                               # full spatial row (always layout-legal)
    else:
        ts = _largest_aligned_divisor(s, max(128, target_elems // c)) or 128
    tn = _pick_tn(n, max(1, target_elems // (c * ts)))
    # Keep >= 2 grid steps when possible so both TensorCores on v7x get work.
    if (n // tn) * (s // ts) < 2:
        if n >= 2:
            tn = _largest_divisor_leq(n, n // 2)
        elif s % 256 == 0:
            ts = _largest_aligned_divisor(s, s // 2) or ts
    return tn, ts


# ----------------------------- wrapper ---------------------------------------

def planar_flow_2d(z_nchw, w, v, b, normalize_u=True, keepdim=True):
    N, C, H, W = z_nchw.shape
    S = H * W
    elt = jnp.dtype(z_nchw.dtype).itemsize
    pack = 8 * max(1, 4 // elt)            # sublane pack: f32->8, bf16->16, int8->32
    c_pad = _round_up(C, pack)

    # --- scalar parameter glue (matches the PyTorch forward) ---
    v_hat = v
    if normalize_u:
        wtu = jnp.squeeze(w @ v.T)
        m_wtu = -1.0 + jax.nn.softplus(wtu)            # stable log1p(exp(wtu))
        v_hat = v + (m_wtu - wtu) * w / (jnp.squeeze(w @ w.T) + EPS)
    wtv = jnp.squeeze(w @ v_hat.T)
    b_scalar = jnp.reshape(b, ())

    scal = jnp.stack([b_scalar, wtv]).astype(jnp.float32)                   # (2,)
    wv = jnp.concatenate([w.reshape(C, 1), v_hat.reshape(C, 1)],
                         axis=1).astype(jnp.float32)                        # (C, 2)

    z = z_nchw.reshape(N, C, S)

    # --- generation-aware slab / VMEM sizing ---
    cap = _vmem_capacity_bytes()                  # 64 MiB (v7x) / 128 MiB (v5e/v6e)
    budget = min(int(cap * 0.60), 80 << 20)       # double-buffered block budget
    # Per-step VMEM ~= 2 * (z + f_z + ld) padded blocks ~= 5x the padded z block,
    # so target ~budget/5 bytes of *padded* z -> un-padded element target:
    target_elems = max(1 << 16, (budget // 5) * C // (c_pad * elt))

    # --- spatial padding guard: a large, non-128-aligned S would otherwise force a
    #     single oversized full-row block (VMEM risk on v7x's 64 MiB). ---
    S_work, pad_s = S, 0
    if S % 128 != 0 and C * S > target_elems:
        S_work = _round_up(S, 128)
        pad_s = S_work - S
        z = jnp.pad(z, ((0, 0), (0, 0), (0, pad_s)))

    tn, ts = _choose_tiles(N, C, S_work, target_elems)
    nb, ns = N // tn, S_work // ts

    # Padded-layout VMEM footprint of the chosen blocks (double-buffered).
    zb = tn * c_pad * _round_up(ts, 128) * elt
    if keepdim:
        dense_ld = (tn == N) or (tn % 8 == 0)
        if dense_ld:
            ldb = _round_up(tn, 8) * _round_up(ts, 128) * 4
        else:
            ldb = tn * 8 * _round_up(ts, 128) * 4
    else:
        ldb = tn * 8 * 128 * 4
    wvb = _round_up(C, 8) * 128 * 4
    need = 2 * (2 * zb + ldb + wvb) + (2 << 20)
    vmem_limit = int(min(max(need, 16 << 20), cap - (2 << 20)))

    in_specs2 = [
        pl.BlockSpec(memory_space=pltpu.MemorySpace.SMEM),        # [b, wtv]
        pl.BlockSpec((C, 2), lambda n, s: (0, 0)),                # [w | v_hat]
        pl.BlockSpec((tn, C, ts), lambda n, s: (n, 0, s)),        # z
    ]
    fz_spec2 = pl.BlockSpec((tn, C, ts), lambda n, s: (n, 0, s))

    if keepdim:
        if dense_ld:
            ld_shape = (N, S_work)
            ld_spec = pl.BlockSpec((tn, ts), lambda n, s: (n, s))
        else:
            ld_shape = (N, 1, S_work)
            ld_spec = pl.BlockSpec((tn, 1, ts), lambda n, s: (n, 0, s))
        ce = pl.CostEstimate(
            flops=(3 * C + 5) * N * S_work,
            transcendentals=2 * N * S_work,
            bytes_accessed=2 * N * C * S_work * elt + N * S_work * 4)
        f_z_flat, ld_flat = pl.pallas_call(
            _planar_kernel_keepdim,
            out_shape=(jax.ShapeDtypeStruct((N, C, S_work), z.dtype),
                       jax.ShapeDtypeStruct(ld_shape, jnp.float32)),
            grid_spec=pltpu.PrefetchScalarGridSpec(
                num_scalar_prefetch=0,
                grid=(nb, ns),
                in_specs=in_specs2,
                out_specs=[fz_spec2, ld_spec]),
            compiler_params=pltpu.CompilerParams(
                dimension_semantics=("parallel", "parallel"),
                vmem_limit_bytes=vmem_limit),
            cost_estimate=ce,
        )(scal, wv, z)
        ld_flat = ld_flat.reshape(N, S_work)
        if pad_s:
            f_z_flat = f_z_flat[:, :, :S]
            ld_flat = ld_flat[:, :S]
        return f_z_flat.reshape(N, C, H, W), ld_flat.reshape(N, H, W)

    # keepdim=False: spatial log|det| sum fused in-kernel.  When there is only one
    # batch step, split the spatial axis into two *parallel* halves so both v7x
    # TensorCores get work; per-half partial sums are added back in the wrapper.
    halves = 2 if (nb < 2 and ns >= 2 and ns % 2 == 0) else 1
    ns_h = ns // halves

    in_specs3 = [
        pl.BlockSpec(memory_space=pltpu.MemorySpace.SMEM),
        pl.BlockSpec((C, 2), lambda n, h, s: (0, 0)),
        pl.BlockSpec((tn, C, ts), lambda n, h, s: (n, 0, h * ns_h + s)),
    ]
    ce = pl.CostEstimate(
        flops=(3 * C + 6) * N * S_work,
        transcendentals=2 * N * S_work,
        bytes_accessed=2 * N * C * S_work * elt + halves * N * 4)
    f_z_flat, ld_part = pl.pallas_call(
        _planar_kernel_sum,
        out_shape=(jax.ShapeDtypeStruct((N, C, S_work), z.dtype),
                   jax.ShapeDtypeStruct((halves, N, 1, 1), jnp.float32)),
        grid_spec=pltpu.PrefetchScalarGridSpec(
            num_scalar_prefetch=0,
            grid=(nb, halves, ns_h),
            in_specs=in_specs3,
            out_specs=[
                pl.BlockSpec((tn, C, ts), lambda n, h, s: (n, 0, h * ns_h + s)),
                pl.BlockSpec((1, tn, 1, 1), lambda n, h, s: (h, n, 0, 0)),
            ]),
        compiler_params=pltpu.CompilerParams(
            dimension_semantics=("parallel", "parallel", "arbitrary"),
            vmem_limit_bytes=vmem_limit),
        cost_estimate=ce,
    )(scal, wv, z)
    ld_sum = jnp.sum(ld_part, axis=(0, 2, 3))                   # (N,)
    if pad_s:
        f_z_flat = f_z_flat[:, :, :S]
        t_b = jnp.tanh(b_scalar)
        ld_sum = ld_sum - pad_s * jnp.log(
            jnp.abs(1.0 + (1.0 - t_b * t_b) * wtv) + EPS)
    return f_z_flat.reshape(N, C, H, W), ld_sum


# ----------------------------- reference & test -------------------------------

def _reference(z, w, v, b):
    """Plain-JAX replica of the PyTorch forward for verification."""
    wtu = jnp.squeeze(w @ v.T)
    m_wtu = -1.0 + jax.nn.softplus(wtu)
    v_hat = v + (m_wtu - wtu) * w / (jnp.squeeze(w @ w.T) + EPS)
    wtz_plus_b = jnp.einsum("nchw,c->nhw", z, w[0]) + jnp.reshape(b, ())
    t = jnp.tanh(wtz_plus_b)
    f_z = z + v_hat[0][None, :, None, None] * t[:, None, :, :]
    det = 1.0 + (1.0 - t ** 2) * jnp.squeeze(w @ v_hat.T)
    return f_z, jnp.log(jnp.abs(det) + EPS)


def _check(z, w, v, b):
    f_z, ld = planar_flow_2d(z, w, v, b, normalize_u=True, keepdim=True)
    f_z2, ld_sum = planar_flow_2d(z, w, v, b, normalize_u=True, keepdim=False)
    jax.block_until_ready((f_z, ld, f_z2, ld_sum))
    f_ref, ld_ref = _reference(z, w, v, b)
    N, C, H, W = z.shape
    assert f_z.shape == (N, C, H, W) and ld.shape == (N, H, W)
    assert ld_sum.shape == (N,)
    assert jnp.allclose(f_z, f_ref, atol=1e-5, rtol=1e-5)
    assert jnp.allclose(f_z2, f_ref, atol=1e-5, rtol=1e-5)
    assert jnp.allclose(ld, ld_ref, atol=1e-5, rtol=1e-5)
    assert jnp.allclose(ld_sum, ld_ref.sum(axis=(1, 2)), atol=1e-4, rtol=1e-4)


if __name__ == "__main__":
    key = jax.random.PRNGKey(0)
    kv, kw, kz1, kz2, kz3 = jax.random.split(key, 5)

    C = 4
    init_sigma = 0.01
    # Deterministic parameter init mirroring the module's __init__ shapes:
    v = init_sigma * jax.random.normal(kv, (1, C), jnp.float32)   # self.v
    w = init_sigma * jax.random.normal(kw, (1, C), jnp.float32)   # self.w
    b = jnp.zeros((1,), jnp.float32)                              # self.b (fill_(0))

    # Primary config from the spec: (N, C, H, W) = (2, 4, 16, 16).
    _check(jax.random.normal(kz1, (2, C, 16, 16), jnp.float32), w, v, b)
    # Exercises the dense 2-D (N, S) log-det store path (tn multiple of 8).
    _check(jax.random.normal(kz2, (16, C, 16, 16), jnp.float32), w, v, b)
    # Exercises the keepdim=False dual-parallel spatial-halves path (N == 1).
    _check(jax.random.normal(kz3, (1, C, 64, 64), jnp.float32), w, v, b)

    print("KERNEL_OK")
</pallas_src>

<mosaic_0001>
module attributes {stable_mosaic.version = 11 : i64} {
  func.func @_planar_kernel_keepdim(%arg0: i32, %arg1: i32, %arg2: memref<2xf32, #tpu.memory_space<smem>>, %arg3: memref<4x2xf32, #tpu.memory_space<vmem>>, %arg4: memref<1x4x256xf32, #tpu.memory_space<vmem>>, %arg5: memref<1x4x256xf32, #tpu.memory_space<vmem>>, %arg6: memref<1x1x256xf32, #tpu.memory_space<vmem>>) attributes {dimension_semantics = [#tpu.dimension_semantics<parallel>, #tpu.dimension_semantics<parallel>], iteration_bounds = array<i64: 2, 1>, scalar_prefetch = 0 : i64, scratch_operands = 0 : i64, tpu.core_type = #tpu.core_type<tc>, window_params = [{transform_indices = @transform_0, window_bounds = array<i64: 2>}, {pipeline_mode = #tpu.pipeline_mode<synchronous>, transform_indices = @transform_1, window_bounds = array<i64: 4, 2>}, {transform_indices = @transform_2, window_bounds = array<i64: 1, 4, 256>}, {transform_indices = @transform_3, window_bounds = array<i64: 1, 4, 256>}, {transform_indices = @transform_4, window_bounds = array<i64: 1, 1, 256>}]} {
    %c0 = arith.constant 0 : index
    %0 = memref.load %arg2[%c0] : memref<2xf32, #tpu.memory_space<smem>>
    %c1 = arith.constant 1 : index
    %1 = memref.load %arg2[%c1] : memref<2xf32, #tpu.memory_space<smem>>
    %c0_0 = arith.constant 0 : index
    %c0_1 = arith.constant 0 : index
    %c0_2 = arith.constant 0 : index
    %2 = vector.load %arg4[%c0_0, %c0_1, %c0_2] : memref<1x4x256xf32, #tpu.memory_space<vmem>>, vector<1x4x256xf32>
    %c0_3 = arith.constant 0 : index
    %c0_4 = arith.constant 0 : index
    %3 = vector.load %arg3[%c0_3, %c0_4] : memref<4x2xf32, #tpu.memory_space<vmem>>, vector<4x2xf32>
    %4 = vector.extract_strided_slice %3 {offsets = [0, 0], sizes = [4, 1], strides = [1, 1]} : vector<4x2xf32> to vector<4x1xf32>
    %5 = vector.shape_cast %4 : vector<4x1xf32> to vector<1x4x1xf32>
    %6 = vector.extract_strided_slice %3 {offsets = [0, 1], sizes = [4, 1], strides = [1, 1]} : vector<4x2xf32> to vector<4x1xf32>
    %7 = vector.shape_cast %6 : vector<4x1xf32> to vector<1x4x1xf32>
    %8 = vector.broadcast %5 : vector<1x4x1xf32> to vector<1x4x256xf32>
    %9 = arith.mulf %2, %8 : vector<1x4x256xf32>
    %cst = arith.constant dense<0.000000e+00> : vector<1x256xf32>
    %10 = vector.multi_reduction <add>, %9, %cst [1] : vector<1x4x256xf32> to vector<1x256xf32>
    %11 = vector.shape_cast %10 : vector<1x256xf32> to vector<1x1x256xf32>
    %12 = vector.broadcast %0 : f32 to vector<1x1x256xf32>
    %13 = arith.addf %11, %12 : vector<1x1x256xf32>
    %14 = math.tanh %13 : vector<1x1x256xf32>
    %15 = vector.broadcast %7 : vector<1x4x1xf32> to vector<1x4x256xf32>
    %16 = vector.broadcast %14 : vector<1x1x256xf32> to vector<1x4x256xf32>
    %17 = arith.mulf %15, %16 : vector<1x4x256xf32>
    %18 = arith.addf %2, %17 : vector<1x4x256xf32>
    %c0_5 = arith.constant 0 : index
    %c0_6 = arith.constant 0 : index
    %c0_7 = arith.constant 0 : index
    %19 = vector.load %arg5[%c0_5, %c0_6, %c0_7] : memref<1x4x256xf32, #tpu.memory_space<vmem>>, vector<1x4x256xf32>
    tpu.vector_store %arg5[%c0_5, %c0_6, %c0_7], %18 {strides = array<i32>} : memref<1x4x256xf32, #tpu.memory_space<vmem>>, vector<1x4x256xf32>,
    %20 = arith.mulf %14, %14 : vector<1x1x256xf32>
    %cst_8 = arith.constant 1.000000e+00 : f32
    %21 = vector.broadcast %cst_8 : f32 to vector<1x1x256xf32>
    %22 = arith.subf %21, %20 : vector<1x1x256xf32>
    %23 = vector.broadcast %1 : f32 to vector<1x1x256xf32>
    %24 = arith.mulf %22, %23 : vector<1x1x256xf32>
    %cst_9 = arith.constant 1.000000e+00 : f32
    %25 = vector.broadcast %cst_9 : f32 to vector<1x1x256xf32>
    %26 = arith.addf %25, %24 : vector<1x1x256xf32>
    %27 = math.absf %26 : vector<1x1x256xf32>
    %cst_10 = arith.constant 1.1920929E-7 : f32
    %28 = vector.broadcast %cst_10 : f32 to vector<1x1x256xf32>
    %29 = arith.addf %27, %28 : vector<1x1x256xf32>
    %30 = math.log %29 : vector<1x1x256xf32>
    %c0_11 = arith.constant 0 : index
    %c0_12 = arith.constant 0 : index
    %c0_13 = arith.constant 0 : index
    %31 = vector.load %arg6[%c0_11, %c0_12, %c0_13] : memref<1x1x256xf32, #tpu.memory_space<vmem>>, vector<1x1x256xf32>
    tpu.vector_store %arg6[%c0_11, %c0_12, %c0_13], %30 {strides = array<i32>} : memref<1x1x256xf32, #tpu.memory_space<vmem>>, vector<1x1x256xf32>,
    return
  }
  func.func @transform_0(%arg0: i32, %arg1: i32) -> i32 {
    %c0_i32 = arith.constant 0 : i32
    %c0_i32_0 = arith.constant 0 : i32
    return %c0_i32 : i32
  }
  func.func @transform_1(%arg0: i32, %arg1: i32) -> (i32, i32) {
    %c0_i32 = arith.constant 0 : i32
    %c0_i32_0 = arith.constant 0 : i32
    %c0_i32_1 = arith.constant 0 : i32
    return %c0_i32, %c0_i32_0 : i32, i32
  }
  func.func @transform_2(%arg0: i32, %arg1: i32) -> (i32, i32, i32) {
    %c0_i32 = arith.constant 0 : i32
    %c0_i32_0 = arith.constant 0 : i32
    return %arg0, %c0_i32, %arg1 : i32, i32, i32
  }
  func.func @transform_3(%arg0: i32, %arg1: i32) -> (i32, i32, i32) {
    %c0_i32 = arith.constant 0 : i32
    %c0_i32_0 = arith.constant 0 : i32
    return %arg0, %c0_i32, %arg1 : i32, i32, i32
  }
  func.func @transform_4(%arg0: i32, %arg1: i32) -> (i32, i32, i32) {
    %c0_i32 = arith.constant 0 : i32
    %c0_i32_0 = arith.constant 0 : i32
    return %arg0, %c0_i32, %arg1 : i32, i32, i32
  }
}

</mosaic_0001>

<llo_original>
// kernel: tpu_custom_call.1
$region0: #{tpu_custom_call.1}
  #allocation0 [shape = 'u32[]', space=smem, size = 0x4, offset = 0x4, fixed_abs, tag = 'smem constant byte address 0x4 - core index']
  #allocation1 [shape = 'u32[144,128]{1,0:T(1,128)}', space=vmem, size = 0x12000, scoped, tag = 'internal scratch']
  %s0 = inlined_call_operand.vmem [shape: f32[2], index: 0, kind: input, shape index: {}]
  %s1 = inlined_call_operand.vmem [shape: f32[4,2], index: 1, kind: input, shape index: {}]
  %s2 = inlined_call_operand.hbm [shape: f32[2,4,256], index: 2, kind: input, shape index: {}]
  %s3 = inlined_call_operand.hbm [shape: f32[2,4,256], index: 3, kind: output, shape index: {0}]
  %s4 = inlined_call_operand.hbm [shape: f32[2,1,256], index: 4, kind: output, shape index: {1}]
  %5 = xla_tuple %s3, %s4
  %s6 = sld [smem:[#allocation0]]
  $region61: #{tpu_custom_call.1} parent=0
    _
  %s8 = ssub.s32 1, %s6
  %s9 = scalar_select 0, %s8, %s6
  $region1: #{tpu_custom_call.1} parent=0
    #allocation2 [shape = 'u8[512]{0}', space=smem, size = 0x200, scoped, tag = 'input window, operand 0, single buffered']
    #allocation3 [shape = 's32[2]{0}', space=sflag, size = 0x8, scoped, tag = 'scoped memory for tpu_custom_call.1']
    #allocation4 [shape = 's32[2]{0}', space=sflag, size = 0x8, scoped, tag = 'scoped memory for tpu_custom_call.1']
    #allocation5 [shape = 's32[2]{0}', space=sflag, size = 0x8, scoped, tag = 'scoped memory for tpu_custom_call.1']
    #allocation6 [shape = 'u8[8192]{0}', space=vmem, size = 0x2000, scoped, tag = 'input window, operand 2']
    #allocation7 [shape = 'u8[8192]{0}', space=vmem, size = 0x2000, scoped, tag = 'output window, operand 0']
    #allocation8 [shape = 'u8[2048]{0}', space=vmem, size = 0x800, scoped, tag = 'output window, operand 1']
    #allocation9 [shape = 's32[2]{0}', space=sflag, size = 0x8, scoped, tag = 'scoped memory for tpu_custom_call.1']
    %10 = vsyncpa [#allocation5], 0
    %11 = vsyncpa [#allocation3], 0
    %s12 = scalar_lea.sflag [#allocation3], 1
    %13 = vsyncpa %s12, 0
    %14 = vsyncpa [#allocation4], 0
    %s15 = scalar_lea.sflag [#allocation4], 1
    %16 = vsyncpa %s15, 0
    %17 = vsyncpa [#allocation9], 0
    %s18 = scalar_lea.sflag [#allocation9], 1
    %19 = vsyncpa %s18, 0
    loop: start=0, step=1, limit=4
    $region2: #{tpu_custom_call.1} parent=1 // loop_pre_header
      _
    $region3: #{tpu_custom_call.1} parent=1 // loop_header
      %s21 = sphi 0, %s25
      %p22 = scmp.ge.s32.totalorder %s21, 4
      %s28 = sphi 0, %s40
      %s29 = sphi 0, %s36
      %s30 = sphi 0, %s28
      %s31 = sphi 0, %s29
      %s32 = sphi 0, %s30
      %s33 = sphi 0, %s31
      %s41 = sphi 0, %s41
      %s43 = sphi 0, %s41
      %s44 = sphi 0, %s43
      %s58 = sphi 0, %s44
      %s62 = sphi 0, %s62
      %s64 = sphi 0, %s62
      %s65 = sphi 0, %s64
      %s79 = sphi 0, %s65
      %s87 = sphi 0, %s89
      %s90 = sphi 0, %s87
      %s91 = sphi 0, %s90
      %s107 = sphi 0, %s91
      %s115 = sphi 0, %s117
      %s118 = sphi 0, %s115
      %s119 = sphi 0, %s118
      %s135 = sphi 0, %s119
      %s143 = sphi 0, %s145
      %s146 = sphi 0, %s143
      %s147 = sphi 0, %s146
      %s163 = sphi 0, %s147
    $region4: #{tpu_custom_call.1} parent=1 // loop_header_branch
      %24 = sbr.rel (%p22) target = $region8
    $region5: #{tpu_custom_call.1} parent=1 // loop_body
      %s26 = ssub.s32 %s21, 1
      %s27 = ssub.s32 %s21, 2
      %s34 = sadd.s32 1, %s29
      %p35 = scmp.ge.s32.totalorder %s34, 1
      %s36 = scalar_select %p35, 0, %s34
      %s37 = sadd.s32 1, %s28
      %s38 = scalar_select %p35, %s37, %s28
      %p39 = scmp.ge.s32.totalorder %s38, 2
      %s40 = scalar_select %p39, 0, %s38
      %s42 = sadd.s32 %s41, 1
      %p45 = scmp.eq.s32.totalorder %s21, 1
      %p46 = scmp.ne.s32.totalorder %s41, %s43
      %p47 = scmp.eq.s32.totalorder %s21, 0
      %p48 = por %p46, %p47
      %p49 = scmp.ne.s32.totalorder %s41, %s43
      %p50 = scmp.eq.s32.totalorder %s26, 1
      %p51 = por %p49, %p50
      %p52 = scmp.ne.s32.totalorder %s43, %s44
      %p53 = scmp.eq.s32.totalorder %s26, 0
      %p54 = por %p52, %p53
      %p55 = scmp.ne.s32.totalorder %s43, %s44
      %p56 = scmp.eq.s32.totalorder %s27, 1
      %p57 = por %p55, %p56
      %p59 = scmp.ne.s32.totalorder %s44, %s58
      %p60 = scmp.eq.s32.totalorder %s27, 0
      %p61 = por %p59, %p60
      %s63 = sadd.s32 %s62, 1
      %p66 = scmp.eq.s32.totalorder %s21, 1
      %p67 = scmp.ne.s32.totalorder %s62, %s64
      %p68 = scmp.eq.s32.totalorder %s21, 0
      %p69 = por %p67, %p68
      %p70 = scmp.ne.s32.totalorder %s62, %s64
      %p71 = scmp.eq.s32.totalorder %s26, 1
      %p72 = por %p70, %p71
      %p73 = scmp.ne.s32.totalorder %s64, %s65
      %p74 = scmp.eq.s32.totalorder %s26, 0
      %p75 = por %p73, %p74
      %p76 = scmp.ne.s32.totalorder %s64, %s65
      %p77 = scmp.eq.s32.totalorder %s27, 1
      %p78 = por %p76, %p77
      %p80 = scmp.ne.s32.totalorder %s65, %s79
      %p81 = scmp.eq.s32.totalorder %s27, 0
      %p82 = por %p80, %p81
      %s83 = ssub.s32 %s28, %s40
      %s84 = ssub.s32 %s29, %s36
      %s85 = sor.u32 %s83, %s84
      %p86 = scmp.eq.s32.totalorder %s85, 0
      %s88 = sadd.s32 %s87, 1
      %s89 = scalar_select %p86, %s87, %s88
      %p92 = pneg %p86
      %p93 = scmp.eq.s32.totalorder %s21, 1
      %p94 = por %p92, %p93
      %p95 = scmp.ne.s32.totalorder %s87, %s90
      %p96 = scmp.eq.s32.totalorder %s21, 0
      %p97 = por %p95, %p96
      %p98 = scmp.ne.s32.totalorder %s87, %s90
      %p99 = scmp.eq.s32.totalorder %s26, 1
      %p100 = por %p98, %p99
      %p101 = scmp.ne.s32.totalorder %s90, %s91
      %p102 = scmp.eq.s32.totalorder %s26, 0
      %p103 = por %p101, %p102
      %p104 = scmp.ne.s32.totalorder %s90, %s91
      %p105 = scmp.eq.s32.totalorder %s27, 1
      %p106 = por %p104, %p105
      %p108 = scmp.ne.s32.totalorder %s91, %s107
      %p109 = scmp.eq.s32.totalorder %s27, 0
      %p110 = por %p108, %p109
      %s111 = ssub.s32 %s28, %s40
      %s112 = ssub.s32 %s29, %s36
      %s113 = sor.u32 %s111, %s112
      %p114 = scmp.eq.s32.totalorder %s113, 0
      %s116 = sadd.s32 %s115, 1
      %s117 = scalar_select %p114, %s115, %s116
      %p120 = pneg %p114
      %p121 = scmp.eq.s32.totalorder %s21, 1
      %p122 = por %p120, %p121
      %p123 = scmp.ne.s32.totalorder %s115, %s118
      %p124 = scmp.eq.s32.totalorder %s21, 0
      %p125 = por %p123, %p124
      %p126 = scmp.ne.s32.totalorder %s115, %s118
      %p127 = scmp.eq.s32.totalorder %s26, 1
      %p128 = por %p126, %p127
      %p129 = scmp.ne.s32.totalorder %s118, %s119
      %p130 = scmp.eq.s32.totalorder %s26, 0
      %p131 = por %p129, %p130
      %p132 = scmp.ne.s32.totalorder %s118, %s119
      %p133 = scmp.eq.s32.totalorder %s27, 1
      %p134 = por %p132, %p133
      %p136 = scmp.ne.s32.totalorder %s119, %s135
      %p137 = scmp.eq.s32.totalorder %s27, 0
      %p138 = por %p136, %p137
      %s139 = ssub.s32 %s28, %s40
      %s140 = ssub.s32 %s29, %s36
      %s141 = sor.u32 %s139, %s140
      %p142 = scmp.eq.s32.totalorder %s141, 0
      %s144 = sadd.s32 %s143, 1
      %s145 = scalar_select %p142, %s143, %s144
      %p148 = pneg %p142
      %p149 = scmp.eq.s32.totalorder %s21, 1
      %p150 = por %p148, %p149
      %p151 = scmp.ne.s32.totalorder %s143, %s146
      %p152 = scmp.eq.s32.totalorder %s21, 0
      %p153 = por %p151, %p152
      %p154 = scmp.ne.s32.totalorder %s143, %s146
      %p155 = scmp.eq.s32.totalorder %s26, 1
      %p156 = por %p154, %p155
      %p157 = scmp.ne.s32.totalorder %s146, %s147
      %p158 = scmp.eq.s32.totalorder %s26, 0
      %p159 = por %p157, %p158
      %p160 = scmp.ne.s32.totalorder %s146, %s147
      %p161 = scmp.eq.s32.totalorder %s27, 1
      %p162 = por %p160, %p161
      %p164 = scmp.ne.s32.totalorder %s147, %s163
      %p165 = scmp.eq.s32.totalorder %s27, 0
      %p166 = por %p164, %p165
      %p167 = scmp.le.s32.totalorder 1, %s21
      %p168 = scmp.lt.s32.totalorder %s21, 3
      %p169 = pnand %p167, %p168
      %p170 = pneg %p169
      // Predicated region
      $region9: #{tpu_custom_call.1} parent=5 // pred_check
        _
      $region10: #{tpu_custom_call.1} parent=5 // pred_check_branch
        %172 = sbr.rel (%p169) target = $region12
      $region11: #{tpu_custom_call.1} parent=5 // pred_region
        %s173 = ssub.s32 %s21, 1
        // Predicated region
        $region13: #{tpu_custom_call.1} parent=11 // pred_check
          %p174 = pneg %p54
        $region14: #{tpu_custom_call.1} parent=11 // pred_check_branch
          %176 = sbr.rel (%p174) target = $region16
        $region15: #{tpu_custom_call.1} parent=11 // pred_region
          %s178 = ssub.s32 16, 16
          %179 = vsyncadd [#allocation5], %s178
          %s181 = sshll.u32 %s0, 4
          %s182 = int_to_ptr.vmem [resolvable:$true] %s181
          %184 = dma.vmem_to_smem %s182, 16, [#allocation2], [#allocation5]
        $region16: #{tpu_custom_call.1} parent=11 // pred_fallthru
          _
        // Predicated region
        $region17: #{tpu_custom_call.1} parent=11 // pred_check
          %p185 = pneg %p75
        $region18: #{tpu_custom_call.1} parent=11 // pred_check_branch
          %187 = sbr.rel (%p185) target = $region20
        $region19: #{tpu_custom_call.1} parent=11 // pred_region
          _
        $region20: #{tpu_custom_call.1} parent=11 // pred_fallthru
          _
      $region12: #{tpu_custom_call.1} parent=5 // pred_fallthru
        _
      %p188 = scmp.lt.s32.totalorder %s21, 2
      // Predicated region
      $region21: #{tpu_custom_call.1} parent=5 // pred_check
        %p189 = pneg %p188
      $region22: #{tpu_custom_call.1} parent=5 // pred_check_branch
        %191 = sbr.rel (%p189) target = $region24
      $region23: #{tpu_custom_call.1} parent=5 // pred_region
        // Predicated region
        $region25: #{tpu_custom_call.1} parent=23 // pred_check
          %p192 = pneg %p97
        $region26: #{tpu_custom_call.1} parent=23 // pred_check_branch
          %194 = sbr.rel (%p192) target = $region28
        $region27: #{tpu_custom_call.1} parent=23 // pred_region
          %s195 = sand.u32 %s87, 1
          %s196 = scalar_lea.sflag [#allocation3], %s195
          %s197 = sand.u32 %s87, 1
          %s198 = smul.addr %s197, 8
          %s199 = scalar_lea.vmem [#allocation6], %s198
          %s200 = smul.u32 2, %s29
          %s202 = ssub.s32 128, 128
          %203 = vsyncadd %s196, %s202
          %s204 = smul.addr %s28, 2
          %s205 = sadd.s32 %s200, %s204
          %s206 = smul.addr %s205, 64
          %s207 = scalar_lea.hbm %s2, %s206
          %s209 = sshll.u32 %s199, 4
          %s210 = int_to_ptr.vmem [resolvable:$true] %s209
          %212 = dma.hbm_to_vmem [thread:$0]  %s207, 128, %s210, %s196
        $region28: #{tpu_custom_call.1} parent=23 // pred_fallthru
          _
      $region24: #{tpu_custom_call.1} parent=5 // pred_fallthru
        _
      %p213 = scmp.le.s32.totalorder 1, %s21
      %p214 = scmp.lt.s32.totalorder %s21, 3
      %p215 = pnand %p213, %p214
      %p216 = pneg %p215
      // Predicated region
      $region29: #{tpu_custom_call.1} parent=5 // pred_check
        _
      $region30: #{tpu_custom_call.1} parent=5 // pred_check_branch
        %218 = sbr.rel (%p215) target = $region32
      $region31: #{tpu_custom_call.1} parent=5 // pred_region
        %s219 = ssub.s32 %s21, 1
        // Predicated region
        $region33: #{tpu_custom_call.1} parent=31 // pred_check
          %p220 = pneg %p54
        $region34: #{tpu_custom_call.1} parent=31 // pred_check_branch
          %222 = sbr.rel (%p220) target = $region36
        $region35: #{tpu_custom_call.1} parent=31 // pred_region
          %223 = dma.done [#allocation5], 16
        $region36: #{tpu_custom_call.1} parent=31 // pred_fallthru
          _
        %s224 = sand.u32 %s90, 1
        %s225 = scalar_lea.sflag [#allocation3], %s224
        %s226 = sand.u32 %s90, 1
        %s227 = smul.addr %s226, 8
        %s228 = scalar_lea.vmem [#allocation6], %s227
        // Predicated region
        $region37: #{tpu_custom_call.1} parent=31 // pred_check
          %p229 = pneg %p103
        $region38: #{tpu_custom_call.1} parent=31 // pred_check_branch
          %231 = sbr.rel (%p229) target = $region40
        $region39: #{tpu_custom_call.1} parent=31 // pred_region
          %232 = dma.done %s225, 128
        $region40: #{tpu_custom_call.1} parent=31 // pred_fallthru
          _
        %233 = sfence
        %p234 = pneg %p54
        %p235 = pneg %p51
        %p236 = pneg %p75
        %p237 = pneg %p72
        %s238 = sand.u32 %s90, 1
        %s239 = scalar_lea.sflag [#allocation3], %s238
        %s240 = sand.u32 %s90, 1
        %s241 = smul.addr %s240, 8
        %s242 = scalar_lea.vmem [#allocation6], %s241
        %p243 = pneg %p103
        %p244 = pneg %p100
        %p245 = pneg %p131
        %p246 = pneg %p128
        %s247 = sand.u32 %s118, 1
        %s248 = scalar_lea.sflag [#allocation4], %s247
        %s249 = sand.u32 %s118, 1
        %s250 = smul.addr %s249, 8
        %s251 = scalar_lea.vmem [#allocation7], %s250
        %p252 = pneg %p159
        %p253 = pneg %p156
        %s254 = sand.u32 %s146, 1
        %s255 = scalar_lea.sflag [#allocation9], %s254
        %s256 = sand.u32 %s146, 1
        %s257 = smul.addr %s256, 2
        %s258 = scalar_lea.vmem [#allocation8], %s257
        %s259 = smul.u32 2, %s31
        %s260 = smul.u32 2, %s31
        %s261 = smul.u32 2, %s31
        %s262 = sld [smem:[#allocation2]]
        %s263 = sld [smem:[#allocation2 + $0x1]]
        %v264 = vld [vmem:[%s228] sm:$0xff]
        %v265 = vld [vmem:[%s1] sm:$0xf]
        %267 = vset.pattern.permute.xlu0 0
        %268 = vperm.xlu0 %267, %v265
        %v269 = vpop.permute.xlu0 %268
        %v271 = vunpack.c.l.s4 839922192
        %v272 = vunpack.c.0.s8 %v271
        %v273 = vlaneseq
        %v274 = vshrl.u32 %v273, 7
        %v275 = vsub.s32 %v272, %v274
        %v276 = vrot.slane %v269, %v275
        %v278 = vmul.f32 %v264, %v276
        %v280 = vcombine.high %v278, %v278
        %vm282 = vcmask 1043456
        %v283 = vsel %vm282, %v278, 0.0
        %v284 = vrot.slane %v283, 4
        %v285 = vadd.f32 %v283, %v284
        %v286 = vrot.slane %v285, 2
        %v287 = vadd.f32 %v285, %v286
        %v288 = vrot.slane %v287, 1
        %v289 = vadd.f32 %v287, %v288
        %v290 = vsel %vm282, %v280, 0.0
        %v291 = vrot.slane %v290, 4
        %v292 = vadd.f32 %v290, %v291
        %v293 = vrot.slane %v292, 2
        %v294 = vadd.f32 %v292, %v293
        %v295 = vrot.slane %v294, 1
        %v296 = vadd.f32 %v294, %v295
        %v297 = vstv %s262
        %v298 = vadd.f32 %v289, %v297
        %v299 = vadd.f32 %v296, %v297
        %v300 = vtanh.pop %v298
        %v301 = vtanh.pop %v299
        %302 = vset.pattern.permute.xlu0 1
        %303 = vperm.xlu0 %302, %v265
        %v304 = vpop.permute.xlu0 %303
        %v306 = vmul.f32 %v304, %v300
        %v307 = vmul.f32 %v304, %v301
        %v310 = vcombine.low %v306, %v307
        %v312 = vadd.f32 %v264, %v310
        %313 = vst [vmem:[%s251] sm:$0xff] %v312
        %v314 = vmul.f32 %v300, %v300
        %v315 = vmul.f32 %v301, %v301
        %v316 = vsub.f32 1.0, %v314
        %v317 = vsub.f32 1.0, %v315
        %v318 = vstv %s263
        %v319 = vmul.f32 %v316, %v318
        %v320 = vmul.f32 %v317, %v318
        %v321 = vadd.f32 %v319, 1.0
        %v322 = vadd.f32 %v320, 1.0
        %v323 = vand.u32 2147483647, %v321
        %v324 = vand.u32 2147483647, %v322
        %v325 = vadd.f32 %v323, 1.1920929e-07
        %v326 = vadd.f32 %v324, 1.1920929e-07
        %v327 = vlog2.pop %v325
        %v328 = vmul.f32 %v327, 0.6931472
        %v329 = vlog2.pop %v326
        %v330 = vmul.f32 %v329, 0.6931472
        %v333 = vcombine.low %v328, %v330
        %v335 = vunpack.c.l.s4 1966171168
        %v336 = vunpack.c.0.s8 %v335
        %v337 = vlaneseq
        %v338 = vshrl.u32 %v337, 7
        %v339 = vsub.s32 %v336, %v338
        %v340 = vrot.slane %v333, %v339
        %v342 = vunpack.c.l.s4 1966171168
        %v343 = vunpack.c.0.s8 %v342
        %v344 = vlaneseq
        %v345 = vshrl.u32 %v344, 7
        %v346 = vsub.s32 %v343, %v345
        %v347 = vrot.slane %v340, %v346
        %v349 = vlaneseq
        %vm350 = vcmp.ge.s32.totalorder %v349, 0
        %vm351 = vcmp.lt.s32.totalorder %v349, 256
        %vm352 = vmand %vm350, %vm351
        %353 = vst.msk [vmem:[%s258] sm:$0x3] %vm352, %v347
        %s354 = sand.u32 %s118, 1
        %s355 = scalar_lea.sflag [#allocation4], %s354
        %s356 = sand.u32 %s118, 1
        %s357 = smul.addr %s356, 8
        %s358 = scalar_lea.vmem [#allocation7], %s357
        %s359 = sand.u32 %s146, 1
        %s360 = scalar_lea.sflag [#allocation9], %s359
        %s361 = sand.u32 %s146, 1
        %s362 = smul.addr %s361, 2
        %s363 = scalar_lea.vmem [#allocation8], %s362
        // Predicated region
        $region41: #{tpu_custom_call.1} parent=31 // pred_check
          %p364 = pneg %p128
        $region42: #{tpu_custom_call.1} parent=31 // pred_check_branch
          %366 = sbr.rel (%p364) target = $region44
        $region43: #{tpu_custom_call.1} parent=31 // pred_region
          %s367 = smul.u32 2, %s31
          %s369 = ssub.s32 128, 128
          %370 = vsyncadd %s355, %s369
          %s371 = smul.addr %s30, 2
          %s372 = sadd.s32 %s367, %s371
          %s373 = smul.addr %s372, 64
          %s374 = scalar_lea.hbm %s3, %s373
          %s376 = sshll.u32 %s358, 4
          %s377 = int_to_ptr.vmem [resolvable:$true] %s376
          %379 = dma.vmem_to_hbm [thread:$0]  %s377, 128, %s374, %s355
        $region44: #{tpu_custom_call.1} parent=31 // pred_fallthru
          _
        // Predicated region
        $region45: #{tpu_custom_call.1} parent=31 // pred_check
          %p380 = pneg %p156
        $region46: #{tpu_custom_call.1} parent=31 // pred_check_branch
          %382 = sbr.rel (%p380) target = $region48
        $region47: #{tpu_custom_call.1} parent=31 // pred_region
          %s383 = smul.u32 2, %s31
          %s385 = ssub.s32 32, 32
          %386 = vsyncadd %s360, %s385
          %s387 = smul.addr %s30, 2
          %s388 = sadd.s32 %s383, %s387
          %s389 = smul.addr %s388, 16
          %s390 = scalar_lea.hbm %s4, %s389
          %s392 = sshll.u32 %s363, 4
          %s393 = int_to_ptr.vmem [resolvable:$true] %s392
          %395 = dma.vmem_to_hbm [thread:$0]  %s393, 32, %s390, %s360
        $region48: #{tpu_custom_call.1} parent=31 // pred_fallthru
          _
      $region32: #{tpu_custom_call.1} parent=5 // pred_fallthru
        _
      %p396 = scmp.le.s32.totalorder 2, %s21
      // Predicated region
      $region49: #{tpu_custom_call.1} parent=5 // pred_check
        %p397 = pneg %p396
      $region50: #{tpu_custom_call.1} parent=5 // pred_check_branch
        %399 = sbr.rel (%p397) target = $region52
      $region51: #{tpu_custom_call.1} parent=5 // pred_region
        %s400 = ssub.s32 %s21, 2
        // Predicated region
        $region53: #{tpu_custom_call.1} parent=51 // pred_check
          %p401 = pneg %p134
        $region54: #{tpu_custom_call.1} parent=51 // pred_check_branch
          %403 = sbr.rel (%p401) target = $region56
        $region55: #{tpu_custom_call.1} parent=51 // pred_region
          %s404 = sand.u32 %s119, 1
          %s405 = scalar_lea.sflag [#allocation4], %s404
          %s406 = sand.u32 %s119, 1
          %s407 = smul.addr %s406, 8
          %s408 = scalar_lea.vmem [#allocation7], %s407
          %409 = dma.done %s405, 128
        $region56: #{tpu_custom_call.1} parent=51 // pred_fallthru
          _
        // Predicated region
        $region57: #{tpu_custom_call.1} parent=51 // pred_check
          %p410 = pneg %p162
        $region58: #{tpu_custom_call.1} parent=51 // pred_check_branch
          %412 = sbr.rel (%p410) target = $region60
        $region59: #{tpu_custom_call.1} parent=51 // pred_region
          %s413 = sand.u32 %s147, 1
          %s414 = scalar_lea.sflag [#allocation9], %s413
          %s415 = sand.u32 %s147, 1
          %s416 = smul.addr %s415, 2
          %s417 = scalar_lea.vmem [#allocation8], %s416
          %418 = dma.done %s414, 32
        $region60: #{tpu_custom_call.1} parent=51 // pred_fallthru
          _
      $region52: #{tpu_custom_call.1} parent=5 // pred_fallthru
        _
    $region6: #{tpu_custom_call.1} parent=1 // loop_footer
      %s25 = sadd.s32 1, %s21
    $region7: #{tpu_custom_call.1} parent=1 // loop_footer_branch
      %20 = sbr.rel target = $region3
    $region8: #{tpu_custom_call.1} parent=1 // loop_exit
      _
    %419 = vsyncpa [#allocation3], 1
    %s420 = scalar_lea.sflag [#allocation3], 1
    %421 = vsyncpa %s420, 1
    %422 = vsyncpa [#allocation4], 1
    %s423 = scalar_lea.sflag [#allocation4], 1
    %424 = vsyncpa %s423, 1
    %425 = vsyncpa [#allocation9], 1
    %s426 = scalar_lea.sflag [#allocation9], 1
    %427 = vsyncpa %s426, 1
    %428 = vsyncpa [#allocation5], 1
    %s429 = scalar_lea.sflag [#allocation5], 1
    %430 = vsyncpa %s429, 1

</llo_original>
